<compile_context>
chip_gen: v7x
topology: tpu7x:2x2x1
jax: 0.10.0
libtpu: 0.0.40
codegen_flags: <defaults>
</compile_context>

<pallas_src>
import functools

import jax
import jax.numpy as jnp
from jax.experimental import pallas as pl
from jax.experimental.pallas import tpu as pltpu


LANE = 512  # lane-dense packing width (multiple of 128) for grad buffers


def _ceil_to(x, m):
    return (x + m - 1) // m * m


# ----------------------------------------------------------------------------
# Kernel 1: forward of the wrapped module (Linear), tiled (M, N, K) matmul
# ----------------------------------------------------------------------------
def _linear_kernel(x_ref, w_ref, b_ref, o_ref):
    k = pl.program_id(2)

    # bf16 operands (x cast in-kernel; w is stored bf16), f32 MXU accumulation.
    part = jnp.dot(x_ref[...].astype(jnp.bfloat16), w_ref[...],
                   preferred_element_type=jnp.float32)

    # Output block index is (i, j), constant over k -> o_ref is the resident
    # f32 accumulator.  Direct assign (+bias) on the first K step, accumulate
    # afterwards; written every step (robust writeback pattern), no scratch.
    @pl.when(k == 0)
    def _():
        o_ref[...] = part + b_ref[...]

    @pl.when(k > 0)
    def _():
        o_ref[...] += part


def _mxu_tile(pref, dim):
    # 256-multiple tiles when the dim allows it (v6e/v7x MXU is 2x256x256);
    # 128-multiples (vreg lane width) otherwise.
    unit = 256 if dim >= 256 else 128
    return min(pref, _ceil_to(dim, unit))


def prep_linear(w, b, *, tn=256, tk=512):
    """One-time weight prep: clamp tiles, pad, cast W to bf16 (cached)."""
    Hin, Hout = w.shape
    tk = _mxu_tile(tk, Hin)
    tn = _mxu_tile(tn, Hout)
    Kp, Np = _ceil_to(Hin, tk), _ceil_to(Hout, tn)
    wp = w if (Kp, Np) == (Hin, Hout) else jnp.pad(
        w, ((0, Kp - Hin), (0, Np - Hout)))
    wp = wp.astype(jnp.bfloat16)
    bp = b if Np == Hout else jnp.pad(b, (0, Np - Hout))
    bp = bp.reshape(1, Np).astype(jnp.float32)
    return wp, bp, Hout, tn, tk


def linear_forward(x, wp, bp, out_dim, tn, tk, *, tm=256):
    """y = x @ w + b, with wp/bp pre-padded; wp stored (in, out) bf16."""
    B, Hin = x.shape
    Kp, Np = wp.shape

    tm = min(tm, _ceil_to(B, 8))
    Mp = _ceil_to(B, tm)
    xp = x
    if Mp != B or Kp != Hin:
        # TODO(synk): ragged M could use a masked final tile instead of a pad.
        xp = jnp.pad(x, ((0, Mp - B), (0, Kp - Hin)))

    out = pl.pallas_call(
        _linear_kernel,
        out_shape=jax.ShapeDtypeStruct((Mp, Np), jnp.float32),
        grid_spec=pltpu.PrefetchScalarGridSpec(
            num_scalar_prefetch=0,
            grid=(Mp // tm, Np // tn, Kp // tk),
            in_specs=[
                pl.BlockSpec((tm, tk), lambda i, j, k: (i, k)),
                pl.BlockSpec((tk, tn), lambda i, j, k: (k, j)),
                pl.BlockSpec((1, tn), lambda i, j, k: (0, j)),
            ],
            out_specs=pl.BlockSpec((tm, tn), lambda i, j, k: (i, j)),
        ),
        compiler_params=pltpu.CompilerParams(
            dimension_semantics=("parallel", "parallel", "arbitrary"),
            vmem_limit_bytes=32 << 20,
        ),
    )(xp, wp, bp)

    if (Mp, Np) != (B, out_dim):
        out = out[:B, :out_dim]
    return out


# ----------------------------------------------------------------------------
# Kernel 2: bucketed gradient all-reduce (sum over W workers, scale by 1/W)
# ----------------------------------------------------------------------------
def _allreduce_kernel(*refs, inv_world):
    # refs = (g_0, ..., g_{W-1}, o_ref): one streaming pass, no accumulator
    # zero-init / re-reads, deferred 1/world_size scale.
    g_refs, o_ref = refs[:-1], refs[-1]
    acc = g_refs[0][...]
    for g in g_refs[1:]:
        acc = acc + g[...]
    o_ref[...] = acc * inv_world


def grad_allreduce(worker_bufs, world_size, *, tile_rows=512):
    """worker_bufs: list of W lane-dense (R, C) f32 flat-grad buffers."""
    W = len(worker_bufs)
    R, C = worker_bufs[0].shape
    bytes_per_row = C * 4

    # Row tile: big (~1 MiB+) blocks for this mem-bound streaming kernel, but
    #  (a) keep (W inputs + 1 output) * double-buffer under a ~24 MiB VMEM
    #      budget (v7x: 64 MiB physical / 32 MiB scoped default), and
    #  (b) prefer >= 2 blocks on the parallel row axis (v7x megacore) when
    #      that still leaves >= 256 KiB blocks.
    max_tr = max(8, ((24 << 20) // ((W + 1) * 2 * bytes_per_row)) // 8 * 8)
    tr_pref = max(8, min(tile_rows, _ceil_to(R, 8), max_tr))
    n_blocks = max(1, -(-R // tr_pref))
    if n_blocks == 1 and R * bytes_per_row >= 2 * (256 << 10):
        n_blocks = 2
    tr = _ceil_to(-(-R // n_blocks), 8)
    Rp = n_blocks * tr

    bufs = [jnp.pad(g, ((0, Rp - R), (0, 0))) if Rp != R else g
            for g in worker_bufs]

    kernel = functools.partial(_allreduce_kernel, inv_world=1.0 / world_size)
    out = pl.pallas_call(
        kernel,
        out_shape=jax.ShapeDtypeStruct((Rp, C), jnp.float32),
        grid_spec=pltpu.PrefetchScalarGridSpec(
            num_scalar_prefetch=0,
            grid=(n_blocks,),
            in_specs=[pl.BlockSpec((tr, C), lambda r: (r, 0))
                      for _ in range(W)],
            out_specs=pl.BlockSpec((tr, C), lambda r: (r, 0)),
        ),
        compiler_params=pltpu.CompilerParams(
            dimension_semantics=("parallel",),
            vmem_limit_bytes=32 << 20,
        ),
    )(*bufs)

    return out[:R] if Rp != R else out


def _as_lane_dense(g, lane=LANE):
    """Reshape (flatten + pad to lane multiple) -> (rows, lane) f32.  For
    contiguous grads whose size is a lane multiple this is copy-free."""
    flat = g.reshape(-1)
    pad = (-flat.shape[0]) % lane
    if pad:
        flat = jnp.pad(flat, (0, pad))
    return flat.reshape(-1, lane).astype(jnp.float32)


def _pack_flat(grads, names, lane=LANE):
    """Multi-param bucket: copy grads into one flat buffer per worker,
    mirroring fairseq's buffer[offset:offset+sz].copy_(grad.view(-1))."""
    flat = jnp.concatenate([grads[k].reshape(-1) for k in names], axis=0)
    return _as_lane_dense(flat, lane)


# ----------------------------------------------------------------------------
# LegacyDistributedDataParallel (JAX version)
# ----------------------------------------------------------------------------
class LegacyDDP:
    def __init__(self, params, world_size, buffer_size=2 ** 28,
                 tm=256, tn=256, tk=512, allreduce_tile_rows=512):
        self.params = dict(params)            # name -> array (module params)
        self.world_size = world_size
        total = sum(int(p.size) for p in self.params.values())
        self.buffer_size = min(buffer_size, total)
        self.allreduce_tile_rows = allreduce_tile_rows
        self.tm = tm
        # Weight cast/padded to bf16 exactly once (not per forward call).
        (self._wp, self._bp, self._out_dim,
         self._tn, self._tk) = prep_linear(self.params["w"],
                                           self.params["b"], tn=tn, tk=tk)

    # forward(*inputs) == self.module(*inputs); module == Linear(w, b)
    def forward(self, x):
        return linear_forward(x, self._wp, self._bp, self._out_dim,
                              self._tn, self._tk, tm=self.tm)

    def _allreduce_bucket(self, names, per_worker_grads):
        if len(names) == 1:
            # Single-param bucket: fairseq skips the buffer copy -> we feed
            # the raw grads (reshape-only, copy-free for lane-multiple sizes).
            name = names[0]
            bufs = [_as_lane_dense(g[name]) for g in per_worker_grads]
        else:
            bufs = [_pack_flat(g, names) for g in per_worker_grads]
        reduced = grad_allreduce(
            bufs, self.world_size,
            tile_rows=self.allreduce_tile_rows).reshape(-1)
        out, offset = {}, 0
        for k in names:
            p = self.params[k]
            sz = int(p.size)
            out[k] = reduced[offset:offset + sz].reshape(p.shape)
            offset += sz
        return out

    def reduce_grads(self, per_worker_grads):
        """Reproduces reduction_fn(): pack params into buckets of at most
        buffer_size elements, all-reduce (sum) each bucket, scale by
        1/world_size (deferred, mathematically equivalent to fairseq's
        divide-before-reduce), scatter back into per-param grads."""
        out = {}
        bucket, offset = [], 0
        for name, p in self.params.items():
            sz = int(p.size)
            if sz > self.buffer_size:
                # Param bigger than the buffer: all-reduce it by itself.
                out.update(self._allreduce_bucket([name], per_worker_grads))
                continue
            if offset + sz > self.buffer_size:
                out.update(self._allreduce_bucket(bucket, per_worker_grads))
                bucket, offset = [], 0
            bucket.append(name)
            offset += sz
        if bucket:
            out.update(self._allreduce_bucket(bucket, per_worker_grads))
        return out


if __name__ == "__main__":
    key = jax.random.PRNGKey(0)
    k_x, k_w, k_b, k_g = jax.random.split(key, 4)

    B, H = 8, 512
    world_size = 4

    x = jax.random.normal(k_x, (B, H), dtype=jnp.float32)
    w = jax.random.normal(k_w, (H, H), dtype=jnp.float32) * 0.02
    b = jax.random.normal(k_b, (H,), dtype=jnp.float32) * 0.01

    # tn=tk=256 (MXU-width tiles on v6e/v7x) with H=512 -> grid (1, 2, 2):
    # exercises resident-output K accumulation and a 2-block parallel N axis.
    ddp = LegacyDDP({"w": w, "b": b}, world_size=world_size,
                    tm=256, tn=256, tk=256, allreduce_tile_rows=512)

    # ---- forward pass ----
    y = jax.block_until_ready(ddp.forward(x))
    y_ref = x @ w + b
    # bf16 MXU operands with f32 accumulation -> loosened tolerance vs f32 ref
    assert jnp.allclose(y, y_ref, atol=2e-2, rtol=2e-2), "forward mismatch"

    # ---- gradient all-reduce path ----
    gkeys = jax.random.split(k_g, world_size)
    per_worker_grads = [
        {
            "w": jax.random.normal(gk, (H, H), dtype=jnp.float32),
            "b": jax.random.normal(jax.random.fold_in(gk, 1), (H,),
                                   dtype=jnp.float32),
        }
        for gk in gkeys
    ]
    ref_w = sum(g["w"] for g in per_worker_grads) / world_size
    ref_b = sum(g["b"] for g in per_worker_grads) / world_size

    # Default buffer_size -> both params share one bucket (multi-param path).
    reduced = ddp.reduce_grads(per_worker_grads)
    for v in reduced.values():
        jax.block_until_ready(v)
    assert jnp.allclose(reduced["w"], ref_w, atol=1e-5, rtol=1e-5)
    assert jnp.allclose(reduced["b"], ref_b, atol=1e-5, rtol=1e-5)

    # Small buffer_size -> "w" (262144 elems) exceeds the buffer and is
    # all-reduced alone (copy-free path); "b" forms its own bucket.  This
    # exercises the original class's bucket-splitting logic.
    ddp_small = LegacyDDP({"w": w, "b": b}, world_size=world_size,
                          buffer_size=65536, tm=256, tn=256, tk=256)
    reduced2 = ddp_small.reduce_grads(per_worker_grads)
    for v in reduced2.values():
        jax.block_until_ready(v)
    assert jnp.allclose(reduced2["w"], ref_w, atol=1e-5, rtol=1e-5)
    assert jnp.allclose(reduced2["b"], ref_b, atol=1e-5, rtol=1e-5)

    print("KERNEL_OK")
</pallas_src>

<mosaic_0001>
module attributes {stable_mosaic.version = 11 : i64} {
  func.func @_linear_kernel(%arg0: i32, %arg1: i32, %arg2: i32, %arg3: memref<8x256xf32, #tpu.memory_space<vmem>>, %arg4: memref<256x256xbf16, #tpu.memory_space<vmem>>, %arg5: memref<1x256xf32, #tpu.memory_space<vmem>>, %arg6: memref<8x256xf32, #tpu.memory_space<vmem>>) attributes {dimension_semantics = [#tpu.dimension_semantics<parallel>, #tpu.dimension_semantics<parallel>, #tpu.dimension_semantics<arbitrary>], iteration_bounds = array<i64: 1, 2, 2>, scalar_prefetch = 0 : i64, scratch_operands = 0 : i64, tpu.core_type = #tpu.core_type<tc>, window_params = [{transform_indices = @transform_0, window_bounds = array<i64: 8, 256>}, {transform_indices = @transform_1, window_bounds = array<i64: 256, 256>}, {transform_indices = @transform_2, window_bounds = array<i64: 1, 256>}, {transform_indices = @transform_3, window_bounds = array<i64: 8, 256>}]} {
    %c0 = arith.constant 0 : index
    %c0_0 = arith.constant 0 : index
    %0 = vector.load %arg3[%c0, %c0_0] : memref<8x256xf32, #tpu.memory_space<vmem>>, vector<8x256xf32>
    %1 = arith.truncf %0 : vector<8x256xf32> to vector<8x256xbf16>
    %c0_1 = arith.constant 0 : index
    %c0_2 = arith.constant 0 : index
    %2 = vector.load %arg4[%c0_1, %c0_2] : memref<256x256xbf16, #tpu.memory_space<vmem>>, vector<256x256xbf16>
    %cst = arith.constant dense<0.000000e+00> : vector<8x256xf32>
    %3 = tpu.matmul %1, %2, %cst {dimension_numbers = #tpu.dot_dimension_numbers<[1], [0], [0], [1], [0, 0, 1, 1], [], []>} : vector<8x256xbf16>, vector<256x256xbf16>, vector<8x256xf32> -> vector<8x256xf32>
    %c0_i32 = arith.constant 0 : i32
    %4 = arith.cmpi eq, %arg2, %c0_i32 : i32
    %5 = arith.extui %4 : i1 to i32
    %c0_i32_3 = arith.constant 0 : i32
    %6 = arith.cmpi ne, %5, %c0_i32_3 : i32
    scf.if %6 {
      %c0_6 = arith.constant 0 : index
      %c0_7 = arith.constant 0 : index
      %10 = vector.load %arg5[%c0_6, %c0_7] : memref<1x256xf32, #tpu.memory_space<vmem>>, vector<1x256xf32>
      %11 = vector.broadcast %10 : vector<1x256xf32> to vector<8x256xf32>
      %12 = arith.addf %3, %11 : vector<8x256xf32>
      %c0_8 = arith.constant 0 : index
      %c0_9 = arith.constant 0 : index
      %13 = vector.load %arg6[%c0_8, %c0_9] : memref<8x256xf32, #tpu.memory_space<vmem>>, vector<8x256xf32>
      tpu.vector_store %arg6[%c0_8, %c0_9], %12 {strides = array<i32>} : memref<8x256xf32, #tpu.memory_space<vmem>>, vector<8x256xf32>,
    } else {
    }
    %c0_i32_4 = arith.constant 0 : i32
    %7 = arith.cmpi sgt, %arg2, %c0_i32_4 : i32
    %8 = arith.extui %7 : i1 to i32
    %c0_i32_5 = arith.constant 0 : i32
    %9 = arith.cmpi ne, %8, %c0_i32_5 : i32
    scf.if %9 {
      %c0_6 = arith.constant 0 : index
      %c0_7 = arith.constant 0 : index
      %10 = vector.load %arg6[%c0_6, %c0_7] : memref<8x256xf32, #tpu.memory_space<vmem>>, vector<8x256xf32>
      %11 = arith.addf %10, %3 : vector<8x256xf32>
      %c0_8 = arith.constant 0 : index
      %c0_9 = arith.constant 0 : index
      %12 = vector.load %arg6[%c0_8, %c0_9] : memref<8x256xf32, #tpu.memory_space<vmem>>, vector<8x256xf32>
      tpu.vector_store %arg6[%c0_8, %c0_9], %11 {strides = array<i32>} : memref<8x256xf32, #tpu.memory_space<vmem>>, vector<8x256xf32>,
    } else {
    }
    return
  }
  func.func @transform_0(%arg0: i32, %arg1: i32, %arg2: i32) -> (i32, i32) {
    %c0_i32 = arith.constant 0 : i32
    return %arg0, %arg2 : i32, i32
  }
  func.func @transform_1(%arg0: i32, %arg1: i32, %arg2: i32) -> (i32, i32) {
    %c0_i32 = arith.constant 0 : i32
    return %arg2, %arg1 : i32, i32
  }
  func.func @transform_2(%arg0: i32, %arg1: i32, %arg2: i32) -> (i32, i32) {
    %c0_i32 = arith.constant 0 : i32
    %c0_i32_0 = arith.constant 0 : i32
    return %c0_i32, %arg1 : i32, i32
  }
  func.func @transform_3(%arg0: i32, %arg1: i32, %arg2: i32) -> (i32, i32) {
    %c0_i32 = arith.constant 0 : i32
    return %arg0, %arg1 : i32, i32
  }
}

</mosaic_0001>

<llo_original>
// kernel: tpu_custom_call.1
$region0: #{tpu_custom_call.1}
  #allocation0 [shape = 'u32[]', space=smem, size = 0x4, offset = 0x4, fixed_abs, tag = 'smem constant byte address 0x4 - core index']
  #allocation1 [shape = 'u32[144,128]{1,0:T(1,128)}', space=vmem, size = 0x12000, scoped, tag = 'internal scratch']
  %s0 = inlined_call_operand.hbm [shape: f32[8,512], index: 0, kind: input, shape index: {}]
  %s1 = inlined_call_operand.hbm [shape: bf16[512,512], index: 1, kind: input, shape index: {}]
  %s2 = inlined_call_operand.vmem [shape: f32[1,512], index: 2, kind: input, shape index: {}]
  %s3 = inlined_call_operand.hbm [shape: f32[8,512], index: 3, kind: output, shape index: {}]
  %s4 = sld [smem:[#allocation0]]
  $region61: #{tpu_custom_call.1} parent=0
    _
  %s6 = ssub.s32 1, %s4
  %s7 = scalar_select 0, %s6, %s4
  $region1: #{tpu_custom_call.1} parent=0
    #allocation2 [shape = 'u8[16384]{0}', space=vmem, size = 0x4000, scoped, tag = 'input window, operand 0']
    #allocation3 [shape = 's32[2]{0}', space=sflag, size = 0x8, scoped, tag = 'scoped memory for tpu_custom_call.1']
    #allocation4 [shape = 's32[2]{0}', space=sflag, size = 0x8, scoped, tag = 'scoped memory for tpu_custom_call.1']
    #allocation5 [shape = 'u8[262144]{0}', space=vmem, size = 0x40000, scoped, tag = 'input window, operand 1']
    #allocation6 [shape = 's32[2]{0}', space=sflag, size = 0x8, scoped, tag = 'scoped memory for tpu_custom_call.1']
    #allocation7 [shape = 'u8[16384]{0}', space=vmem, size = 0x4000, scoped, tag = 'output window, operand 0']
    %8 = vsyncpa [#allocation3], 0
    %s9 = scalar_lea.sflag [#allocation3], 1
    %10 = vsyncpa %s9, 0
    %11 = vsyncpa [#allocation6], 0
    %s12 = scalar_lea.sflag [#allocation6], 1
    %13 = vsyncpa %s12, 0
    %14 = vsyncpa [#allocation4], 0
    %s15 = scalar_lea.sflag [#allocation4], 1
    %16 = vsyncpa %s15, 0
    loop: start=0, step=1, limit=6
    $region2: #{tpu_custom_call.1} parent=1 // loop_pre_header
      _
    $region3: #{tpu_custom_call.1} parent=1 // loop_header
      %s18 = sphi 0, %s22
      %p19 = scmp.ge.s32.totalorder %s18, 6
      %s25 = sphi 0, %s44
      %s26 = sphi 0, %s40
      %s27 = sphi 0, %s36
      %s28 = sphi 0, %s25
      %s29 = sphi 0, %s26
      %s30 = sphi 0, %s27
      %s31 = sphi 0, %s28
      %s32 = sphi 0, %s29
      %s33 = sphi 0, %s30
      %s49 = sphi 0, %s51
      %s52 = sphi 0, %s49
      %s53 = sphi 0, %s52
      %s69 = sphi 0, %s53
      %s77 = sphi 0, %s79
      %s80 = sphi 0, %s77
      %s81 = sphi 0, %s80
      %s97 = sphi 0, %s81
      %s103 = sphi 0, %s105
      %s106 = sphi 0, %s103
      %s107 = sphi 0, %s106
      %s123 = sphi 0, %s107
      %s131 = sphi 0, %s133
      %s134 = sphi 0, %s131
      %s135 = sphi 0, %s134
      %s151 = sphi 0, %s135
    $region4: #{tpu_custom_call.1} parent=1 // loop_header_branch
      %21 = sbr.rel (%p19) target = $region8
    $region5: #{tpu_custom_call.1} parent=1 // loop_body
      %s23 = ssub.s32 %s18, 1
      %s24 = ssub.s32 %s18, 2
      %s34 = sadd.s32 1, %s27
      %p35 = scmp.ge.s32.totalorder %s34, 2
      %s36 = scalar_select %p35, 0, %s34
      %s37 = sadd.s32 1, %s26
      %s38 = scalar_select %p35, %s37, %s26
      %p39 = scmp.ge.s32.totalorder %s38, 2
      %s40 = scalar_select %p39, 0, %s38
      %s41 = sadd.s32 1, %s25
      %s42 = scalar_select %p39, %s41, %s25
      %p43 = scmp.ge.s32.totalorder %s42, 1
      %s44 = scalar_select %p43, 0, %s42
      %s45 = ssub.s32 %s25, %s44
      %s46 = ssub.s32 %s27, %s36
      %s47 = sor.u32 %s45, %s46
      %p48 = scmp.eq.s32.totalorder %s47, 0
      %s50 = sadd.s32 %s49, 1
      %s51 = scalar_select %p48, %s49, %s50
      %p54 = pneg %p48
      %p55 = scmp.eq.s32.totalorder %s18, 3
      %p56 = por %p54, %p55
      %p57 = scmp.ne.s32.totalorder %s49, %s52
      %p58 = scmp.eq.s32.totalorder %s18, 0
      %p59 = por %p57, %p58
      %p60 = scmp.ne.s32.totalorder %s49, %s52
      %p61 = scmp.eq.s32.totalorder %s23, 3
      %p62 = por %p60, %p61
      %p63 = scmp.ne.s32.totalorder %s52, %s53
      %p64 = scmp.eq.s32.totalorder %s23, 0
      %p65 = por %p63, %p64
      %p66 = scmp.ne.s32.totalorder %s52, %s53
      %p67 = scmp.eq.s32.totalorder %s24, 3
      %p68 = por %p66, %p67
      %p70 = scmp.ne.s32.totalorder %s53, %s69
      %p71 = scmp.eq.s32.totalorder %s24, 0
      %p72 = por %p70, %p71
      %s73 = ssub.s32 %s27, %s36
      %s74 = ssub.s32 %s26, %s40
      %s75 = sor.u32 %s73, %s74
      %p76 = scmp.eq.s32.totalorder %s75, 0
      %s78 = sadd.s32 %s77, 1
      %s79 = scalar_select %p76, %s77, %s78
      %p82 = pneg %p76
      %p83 = scmp.eq.s32.totalorder %s18, 3
      %p84 = por %p82, %p83
      %p85 = scmp.ne.s32.totalorder %s77, %s80
      %p86 = scmp.eq.s32.totalorder %s18, 0
      %p87 = por %p85, %p86
      %p88 = scmp.ne.s32.totalorder %s77, %s80
      %p89 = scmp.eq.s32.totalorder %s23, 3
      %p90 = por %p88, %p89
      %p91 = scmp.ne.s32.totalorder %s80, %s81
      %p92 = scmp.eq.s32.totalorder %s23, 0
      %p93 = por %p91, %p92
      %p94 = scmp.ne.s32.totalorder %s80, %s81
      %p95 = scmp.eq.s32.totalorder %s24, 3
      %p96 = por %p94, %p95
      %p98 = scmp.ne.s32.totalorder %s81, %s97
      %p99 = scmp.eq.s32.totalorder %s24, 0
      %p100 = por %p98, %p99
      %s101 = ssub.s32 %s26, %s40
      %p102 = scmp.eq.s32.totalorder %s101, 0
      %s104 = sadd.s32 %s103, 1
      %s105 = scalar_select %p102, %s103, %s104
      %p108 = pneg %p102
      %p109 = scmp.eq.s32.totalorder %s18, 3
      %p110 = por %p108, %p109
      %p111 = scmp.ne.s32.totalorder %s103, %s106
      %p112 = scmp.eq.s32.totalorder %s18, 0
      %p113 = por %p111, %p112
      %p114 = scmp.ne.s32.totalorder %s103, %s106
      %p115 = scmp.eq.s32.totalorder %s23, 3
      %p116 = por %p114, %p115
      %p117 = scmp.ne.s32.totalorder %s106, %s107
      %p118 = scmp.eq.s32.totalorder %s23, 0
      %p119 = por %p117, %p118
      %p120 = scmp.ne.s32.totalorder %s106, %s107
      %p121 = scmp.eq.s32.totalorder %s24, 3
      %p122 = por %p120, %p121
      %p124 = scmp.ne.s32.totalorder %s107, %s123
      %p125 = scmp.eq.s32.totalorder %s24, 0
      %p126 = por %p124, %p125
      %s127 = ssub.s32 %s25, %s44
      %s128 = ssub.s32 %s26, %s40
      %s129 = sor.u32 %s127, %s128
      %p130 = scmp.eq.s32.totalorder %s129, 0
      %s132 = sadd.s32 %s131, 1
      %s133 = scalar_select %p130, %s131, %s132
      %p136 = pneg %p130
      %p137 = scmp.eq.s32.totalorder %s18, 3
      %p138 = por %p136, %p137
      %p139 = scmp.ne.s32.totalorder %s131, %s134
      %p140 = scmp.eq.s32.totalorder %s18, 0
      %p141 = por %p139, %p140
      %p142 = scmp.ne.s32.totalorder %s131, %s134
      %p143 = scmp.eq.s32.totalorder %s23, 3
      %p144 = por %p142, %p143
      %p145 = scmp.ne.s32.totalorder %s134, %s135
      %p146 = scmp.eq.s32.totalorder %s23, 0
      %p147 = por %p145, %p146
      %p148 = scmp.ne.s32.totalorder %s134, %s135
      %p149 = scmp.eq.s32.totalorder %s24, 3
      %p150 = por %p148, %p149
      %p152 = scmp.ne.s32.totalorder %s135, %s151
      %p153 = scmp.eq.s32.totalorder %s24, 0
      %p154 = por %p152, %p153
      %p155 = scmp.le.s32.totalorder 1, %s18
      %p156 = scmp.lt.s32.totalorder %s18, 5
      %p157 = pnand %p155, %p156
      %p158 = pneg %p157
      // Predicated region
      $region9: #{tpu_custom_call.1} parent=5 // pred_check
        _
      $region10: #{tpu_custom_call.1} parent=5 // pred_check_branch
        %160 = sbr.rel (%p157) target = $region12
      $region11: #{tpu_custom_call.1} parent=5 // pred_region
        %s161 = ssub.s32 %s18, 1
      $region12: #{tpu_custom_call.1} parent=5 // pred_fallthru
        _
      %p162 = scmp.lt.s32.totalorder %s18, 4
      // Predicated region
      $region13: #{tpu_custom_call.1} parent=5 // pred_check
        %p163 = pneg %p162
      $region14: #{tpu_custom_call.1} parent=5 // pred_check_branch
        %165 = sbr.rel (%p163) target = $region16
      $region15: #{tpu_custom_call.1} parent=5 // pred_region
        // Predicated region
        $region17: #{tpu_custom_call.1} parent=15 // pred_check
          %p166 = pneg %p59
        $region18: #{tpu_custom_call.1} parent=15 // pred_check_branch
          %168 = sbr.rel (%p166) target = $region20
        $region19: #{tpu_custom_call.1} parent=15 // pred_region
          %s169 = sand.u32 %s49, 1
          %s170 = scalar_lea.sflag [#allocation3], %s169
          %s171 = sand.u32 %s49, 1
          %s172 = smul.addr %s171, 16
          %s173 = scalar_lea.vmem [#allocation2], %s172
          %s174 = smul.u32 2, %s27
          %s176 = ssub.s32 256, 256
          %177 = vsyncadd %s170, %s176
          %s178 = smul.addr %s25, 4
          %s179 = sadd.s32 %s174, %s178
          %s180 = smul.addr %s179, 128
          %s181 = scalar_lea.hbm %s0, %s180
          %s183 = sshll.u32 %s173, 4
          %s184 = int_to_ptr.vmem [resolvable:$true] %s183
          %186 = dma.hbm_to_vmem [thread:$0]  %s181, 256, %s184, %s170
        $region20: #{tpu_custom_call.1} parent=15 // pred_fallthru
          _
        // Predicated region
        $region21: #{tpu_custom_call.1} parent=15 // pred_check
          %p187 = pneg %p87
        $region22: #{tpu_custom_call.1} parent=15 // pred_check_branch
          %189 = sbr.rel (%p187) target = $region24
        $region23: #{tpu_custom_call.1} parent=15 // pred_region
          %s190 = sand.u32 %s77, 1
          %s191 = scalar_lea.sflag [#allocation6], %s190
          %s192 = sand.u32 %s77, 1
          %s193 = smul.addr %s192, 256
          %s194 = scalar_lea.vmem [#allocation5], %s193
          %s195 = smul.u32 32, %s27
          %s196 = smul.u32 2, %s26
          %s198 = ssub.s32 4096, 4096
          %199 = vsyncadd %s191, %s198
          %s200 = smul.addr %s195, 4
          %s201 = sadd.s32 %s196, %s200
          %s202 = smul.addr %s201, 64
          %s203 = scalar_lea.hbm %s1, %s202
          %s204 = sshll.u32 %s194, 4
          %s205 = int_to_ptr.vmem [resolvable:$true] %s204
          %210 = dma.hbm_to_vmem [thread:$0]  %s203, 4096, %s205, %s191, 256, 128, 8
        $region24: #{tpu_custom_call.1} parent=15 // pred_fallthru
          _
        // Predicated region
        $region25: #{tpu_custom_call.1} parent=15 // pred_check
          %p211 = pneg %p113
        $region26: #{tpu_custom_call.1} parent=15 // pred_check_branch
          %213 = sbr.rel (%p211) target = $region28
        $region27: #{tpu_custom_call.1} parent=15 // pred_region
          %s214 = smul.u32 2, %s26
          %p215 = scmp.lt.s32.totalorder %s214, 3
          %s216 = scalar_select %p215, %s214, 3
          %s217 = scalar_lea.vmem %s2, %s216
          %s218 = smul.u32 2, %s26
        $region28: #{tpu_custom_call.1} parent=15 // pred_fallthru
          _
      $region16: #{tpu_custom_call.1} parent=5 // pred_fallthru
        _
      %p219 = scmp.le.s32.totalorder 1, %s18
      %p220 = scmp.lt.s32.totalorder %s18, 5
      %p221 = pnand %p219, %p220
      %p222 = pneg %p221
      // Predicated region
      $region29: #{tpu_custom_call.1} parent=5 // pred_check
        _
      $region30: #{tpu_custom_call.1} parent=5 // pred_check_branch
        %224 = sbr.rel (%p221) target = $region32
      $region31: #{tpu_custom_call.1} parent=5 // pred_region
        %s225 = ssub.s32 %s18, 1
        %s226 = sand.u32 %s52, 1
        %s227 = scalar_lea.sflag [#allocation3], %s226
        %s228 = sand.u32 %s52, 1
        %s229 = smul.addr %s228, 16
        %s230 = scalar_lea.vmem [#allocation2], %s229
        // Predicated region
        $region33: #{tpu_custom_call.1} parent=31 // pred_check
          %p231 = pneg %p65
        $region34: #{tpu_custom_call.1} parent=31 // pred_check_branch
          %233 = sbr.rel (%p231) target = $region36
        $region35: #{tpu_custom_call.1} parent=31 // pred_region
          %234 = dma.done %s227, 256
        $region36: #{tpu_custom_call.1} parent=31 // pred_fallthru
          _
        %s235 = sand.u32 %s80, 1
        %s236 = scalar_lea.sflag [#allocation6], %s235
        %s237 = sand.u32 %s80, 1
        %s238 = smul.addr %s237, 256
        %s239 = scalar_lea.vmem [#allocation5], %s238
        // Predicated region
        $region37: #{tpu_custom_call.1} parent=31 // pred_check
          %p240 = pneg %p93
        $region38: #{tpu_custom_call.1} parent=31 // pred_check_branch
          %242 = sbr.rel (%p240) target = $region40
        $region39: #{tpu_custom_call.1} parent=31 // pred_region
          %243 = dma.done %s236, 4096
        $region40: #{tpu_custom_call.1} parent=31 // pred_fallthru
          _
        %s244 = sand.u32 %s52, 1
        %s245 = scalar_lea.sflag [#allocation3], %s244
        %s246 = sand.u32 %s52, 1
        %s247 = smul.addr %s246, 16
        %s248 = scalar_lea.vmem [#allocation2], %s247
        %p249 = pneg %p65
        %p250 = pneg %p62
        %s251 = sand.u32 %s80, 1
        %s252 = scalar_lea.sflag [#allocation6], %s251
        %s253 = sand.u32 %s80, 1
        %s254 = smul.addr %s253, 256
        %s255 = scalar_lea.vmem [#allocation5], %s254
        %p256 = pneg %p93
        %p257 = pneg %p90
        %s258 = smul.u32 2, %s29
        %p259 = scmp.lt.s32.totalorder %s258, 3
        %s260 = scalar_select %p259, %s258, 3
        %s261 = scalar_lea.vmem %s2, %s260
        %p262 = pneg %p119
        %p263 = pneg %p116
        %p264 = pneg %p147
        %p265 = pneg %p144
        %s266 = sand.u32 %s134, 1
        %s267 = scalar_lea.sflag [#allocation4], %s266
        %s268 = sand.u32 %s134, 1
        %s269 = smul.addr %s268, 16
        %s270 = scalar_lea.vmem [#allocation7], %s269
        %s271 = smul.u32 2, %s30
        %s272 = smul.u32 32, %s30
        %s273 = smul.u32 2, %s29
        %s274 = smul.u32 2, %s29
        %p275 = scmp.lt.s32.totalorder %s274, 3
        %s276 = scalar_select %p275, %s274, 3
        %s277 = scalar_lea.vmem %s2, %s276
        %s278 = smul.u32 2, %s29
        %s279 = smul.u32 2, %s29
        %v280 = vld [vmem:[%s230] sm:$0xff]
        %v281 = vld [vmem:[%s230 + $0x8] sm:$0xff]
        %v282 = vpack.c.bf16 %v280, %v280
        %v283 = vpack.c.bf16 %v281, %v281
        %v284 = vld [vmem:[%s239] sm:$0xff]
        %v285 = vld [vmem:[%s239 + $0x8] sm:$0xff]
        %v286 = vld [vmem:[%s239 + $0x10] sm:$0xff]
        %v287 = vld [vmem:[%s239 + $0x18] sm:$0xff]
        %v288 = vld [vmem:[%s239 + $0x20] sm:$0xff]
        %v289 = vld [vmem:[%s239 + $0x28] sm:$0xff]
        %v290 = vld [vmem:[%s239 + $0x30] sm:$0xff]
        %v291 = vld [vmem:[%s239 + $0x38] sm:$0xff]
        %v292 = vld [vmem:[%s239 + $0x40] sm:$0xff]
        %v293 = vld [vmem:[%s239 + $0x48] sm:$0xff]
        %v294 = vld [vmem:[%s239 + $0x50] sm:$0xff]
        %v295 = vld [vmem:[%s239 + $0x58] sm:$0xff]
        %v296 = vld [vmem:[%s239 + $0x60] sm:$0xff]
        %v297 = vld [vmem:[%s239 + $0x68] sm:$0xff]
        %v298 = vld [vmem:[%s239 + $0x70] sm:$0xff]
        %v299 = vld [vmem:[%s239 + $0x78] sm:$0xff]
        %v300 = vld [vmem:[%s239 + $0x80] sm:$0xff]
        %v301 = vld [vmem:[%s239 + $0x88] sm:$0xff]
        %v302 = vld [vmem:[%s239 + $0x90] sm:$0xff]
        %v303 = vld [vmem:[%s239 + $0x98] sm:$0xff]
        %v304 = vld [vmem:[%s239 + $0xa0] sm:$0xff]
        %v305 = vld [vmem:[%s239 + $0xa8] sm:$0xff]
        %v306 = vld [vmem:[%s239 + $0xb0] sm:$0xff]
        %v307 = vld [vmem:[%s239 + $0xb8] sm:$0xff]
        %v308 = vld [vmem:[%s239 + $0xc0] sm:$0xff]
        %v309 = vld [vmem:[%s239 + $0xc8] sm:$0xff]
        %v310 = vld [vmem:[%s239 + $0xd0] sm:$0xff]
        %v311 = vld [vmem:[%s239 + $0xd8] sm:$0xff]
        %v312 = vld [vmem:[%s239 + $0xe0] sm:$0xff]
        %v313 = vld [vmem:[%s239 + $0xe8] sm:$0xff]
        %v314 = vld [vmem:[%s239 + $0xf0] sm:$0xff]
        %v315 = vld [vmem:[%s239 + $0xf8] sm:$0xff]
        %v348 = vunpack.c.l.b16 %v284
        %v349 = vunpack.c.h.b16 %v284
        %v350 = vunpack.c.l.b16 %v285
        %v351 = vunpack.c.h.b16 %v285
        %v352 = vunpack.c.l.b16 %v286
        %v353 = vunpack.c.h.b16 %v286
        %v354 = vunpack.c.l.b16 %v287
        %v355 = vunpack.c.h.b16 %v287
        %v356 = vunpack.c.l.b16 %v288
        %v357 = vunpack.c.h.b16 %v288
        %v358 = vunpack.c.l.b16 %v289
        %v359 = vunpack.c.h.b16 %v289
        %v360 = vunpack.c.l.b16 %v290
        %v361 = vunpack.c.h.b16 %v290
        %v362 = vunpack.c.l.b16 %v291
        %v363 = vunpack.c.h.b16 %v291
        %v364 = vunpack.c.l.b16 %v292
        %v365 = vunpack.c.h.b16 %v292
        %v366 = vunpack.c.l.b16 %v293
        %v367 = vunpack.c.h.b16 %v293
        %v368 = vunpack.c.l.b16 %v294
        %v369 = vunpack.c.h.b16 %v294
        %v370 = vunpack.c.l.b16 %v295
        %v371 = vunpack.c.h.b16 %v295
        %v372 = vunpack.c.l.b16 %v296
        %v373 = vunpack.c.h.b16 %v296
        %v374 = vunpack.c.l.b16 %v297
        %v375 = vunpack.c.h.b16 %v297
        %v376 = vunpack.c.l.b16 %v298
        %v377 = vunpack.c.h.b16 %v298
        %v378 = vunpack.c.l.b16 %v299
        %v379 = vunpack.c.h.b16 %v299
        %v380 = vunpack.c.l.b16 %v300
        %v381 = vunpack.c.h.b16 %v300
        %v382 = vunpack.c.l.b16 %v301
        %v383 = vunpack.c.h.b16 %v301
        %v384 = vunpack.c.l.b16 %v302
        %v385 = vunpack.c.h.b16 %v302
        %v386 = vunpack.c.l.b16 %v303
        %v387 = vunpack.c.h.b16 %v303
        %v388 = vunpack.c.l.b16 %v304
        %v389 = vunpack.c.h.b16 %v304
        %v390 = vunpack.c.l.b16 %v305
        %v391 = vunpack.c.h.b16 %v305
        %v392 = vunpack.c.l.b16 %v306
        %v393 = vunpack.c.h.b16 %v306
        %v394 = vunpack.c.l.b16 %v307
        %v395 = vunpack.c.h.b16 %v307
        %v396 = vunpack.c.l.b16 %v308
        %v397 = vunpack.c.h.b16 %v308
        %v398 = vunpack.c.l.b16 %v309
        %v399 = vunpack.c.h.b16 %v309
        %v400 = vunpack.c.l.b16 %v310
        %v401 = vunpack.c.h.b16 %v310
        %v402 = vunpack.c.l.b16 %v311
        %v403 = vunpack.c.h.b16 %v311
        %v404 = vunpack.c.l.b16 %v312
        %v405 = vunpack.c.h.b16 %v312
        %v406 = vunpack.c.l.b16 %v313
        %v407 = vunpack.c.h.b16 %v313
        %v408 = vunpack.c.l.b16 %v314
        %v409 = vunpack.c.h.b16 %v314
        %v410 = vunpack.c.l.b16 %v315
        %v411 = vunpack.c.h.b16 %v315
        %v412 = vpack.c.b16 %v350, %v348
        %v413 = vpack.c.b16 %v351, %v349
        %v414 = vpack.c.b16 %v354, %v352
        %v415 = vpack.c.b16 %v355, %v353
        %v416 = vpack.c.b16 %v358, %v356
        %v417 = vpack.c.b16 %v359, %v357
        %v418 = vpack.c.b16 %v362, %v360
        %v419 = vpack.c.b16 %v363, %v361
        %v420 = vpack.c.b16 %v366, %v364
        %v421 = vpack.c.b16 %v367, %v365
        %v422 = vpack.c.b16 %v370, %v368
        %v423 = vpack.c.b16 %v371, %v369
        %v424 = vpack.c.b16 %v374, %v372
        %v425 = vpack.c.b16 %v375, %v373
        %v426 = vpack.c.b16 %v378, %v376
        %v427 = vpack.c.b16 %v379, %v377
        %v428 = vpack.c.b16 %v382, %v380
        %v429 = vpack.c.b16 %v383, %v381
        %v430 = vpack.c.b16 %v386, %v384
        %v431 = vpack.c.b16 %v387, %v385
        %v432 = vpack.c.b16 %v390, %v388
        %v433 = vpack.c.b16 %v391, %v389
        %v434 = vpack.c.b16 %v394, %v392
        %v435 = vpack.c.b16 %v395, %v393
        %v436 = vpack.c.b16 %v398, %v396
        %v437 = vpack.c.b16 %v399, %v397
        %v438 = vpack.c.b16 %v402, %v400
        %v439 = vpack.c.b16 %v403, %v401
        %v440 = vpack.c.b16 %v406, %v404
        %v441 = vpack.c.b16 %v407, %v405
        %v442 = vpack.c.b16 %v410, %v408
        %v443 = vpack.c.b16 %v411, %v409
        %476 = vmatprep.subr.bf16.mxu0 %v413
        %477 = vmatpush1.bf16.msra.mxu0 %v412
        %478 = vmatprep.subr.bf16.mxu0 %v415
        %479 = vmatpush1.bf16.msra.mxu0 %v414
        %480 = vmatprep.subr.bf16.mxu0 %v417
        %481 = vmatpush1.bf16.msra.mxu0 %v416
        %482 = vmatprep.subr.bf16.mxu0 %v419
        %483 = vmatpush1.bf16.msra.mxu0 %v418
        %484 = vmatprep.subr.bf16.mxu0 %v421
        %485 = vmatpush1.bf16.msra.mxu0 %v420
        %486 = vmatprep.subr.bf16.mxu0 %v423
        %487 = vmatpush1.bf16.msra.mxu0 %v422
        %488 = vmatprep.subr.bf16.mxu0 %v425
        %489 = vmatpush1.bf16.msra.mxu0 %v424
        %490 = vmatprep.subr.bf16.mxu0 %v427
        %491 = vmatpush1.bf16.msra.mxu0 %v426
        %492 = vmatprep.subr.bf16.mxu0 %v429
        %493 = vmatpush1.bf16.msra.mxu0 %v428
        %494 = vmatprep.subr.bf16.mxu0 %v431
        %495 = vmatpush1.bf16.msra.mxu0 %v430
        %496 = vmatprep.subr.bf16.mxu0 %v433
        %497 = vmatpush1.bf16.msra.mxu0 %v432
        %498 = vmatprep.subr.bf16.mxu0 %v435
        %499 = vmatpush1.bf16.msra.mxu0 %v434
        %500 = vmatprep.subr.bf16.mxu0 %v437
        %501 = vmatpush1.bf16.msra.mxu0 %v436
        %502 = vmatprep.subr.bf16.mxu0 %v439
        %503 = vmatpush1.bf16.msra.mxu0 %v438
        %504 = vmatprep.subr.bf16.mxu0 %v441
        %505 = vmatpush1.bf16.msra.mxu0 %v440
        %506 = vmatprep.subr.bf16.mxu0 %v443
        %507 = vmatpush1.bf16.msra.mxu0 %v442
        %508 = vmatprep.mubr.bf16.mxu0 %v283
        %509 = vmatmul.mubr.bf16.gmra.mrb[0].mxu0 %v282
        %v510 = vpop.f32.mrb[0].mxu0
        %v511 = vadd.f32 0.0, %v510
        %v512 = vpop.f32.mrb[0].mxu0
        %v513 = vadd.f32 0.0, %v512
        %v514 = vpop.f32.mrb[0].mxu0
        %v515 = vpop.f32.mrb[0].mxu0
        %516 = vdwg.mxu0
        %p517 = scmp.eq.s32.totalorder %s30, 0
        // Predicated region
        $region41: #{tpu_custom_call.1} parent=31 // pred_check
          %p518 = pneg %p517
        $region42: #{tpu_custom_call.1} parent=31 // pred_check_branch
          %520 = sbr.rel (%p518) target = $region44
        $region43: #{tpu_custom_call.1} parent=31 // pred_region
          %v521 = vld [vmem:[%s277] sm:$0x3]
          %v523 = vlaneseq
          %v524 = vshrl.u32 %v523, 7
          %v525 = vsub.s32 0, %v524
          %v526 = vrot.slane %v521, %v525
          %v527 = vlaneseq
          %v528 = vshrl.u32 %v527, 7
          %v529 = vsub.s32 1, %v528
          %v530 = vrot.slane %v521, %v529
          %v533 = vadd.f32 %v511, %v526
          %v534 = vadd.f32 %v513, %v530
          %535 = vst [vmem:[%s270] sm:$0xff] %v533
          %536 = vst [vmem:[%s270 + $0x8] sm:$0xff] %v534
        $region44: #{tpu_custom_call.1} parent=31 // pred_fallthru
          _
        %p537 = scmp.gt.s32.totalorder %s30, 0
        // Predicated region
        $region45: #{tpu_custom_call.1} parent=31 // pred_check
          %p538 = pneg %p537
        $region46: #{tpu_custom_call.1} parent=31 // pred_check_branch
          %540 = sbr.rel (%p538) target = $region48
        $region47: #{tpu_custom_call.1} parent=31 // pred_region
          %v541 = vld [vmem:[%s270] sm:$0xff]
          %v542 = vld [vmem:[%s270 + $0x8] sm:$0xff]
          %v543 = vadd.f32 %v541, %v511
          %v544 = vadd.f32 %v542, %v513
          %545 = vst [vmem:[%s270] sm:$0xff] %v543
          %546 = vst [vmem:[%s270 + $0x8] sm:$0xff] %v544
        $region48: #{tpu_custom_call.1} parent=31 // pred_fallthru
          _
        %s547 = sand.u32 %s134, 1
        %s548 = scalar_lea.sflag [#allocation4], %s547
        %s549 = sand.u32 %s134, 1
        %s550 = smul.addr %s549, 16
        %s551 = scalar_lea.vmem [#allocation7], %s550
        // Predicated region
        $region49: #{tpu_custom_call.1} parent=31 // pred_check
          %p552 = pneg %p144
        $region50: #{tpu_custom_call.1} parent=31 // pred_check_branch
          %554 = sbr.rel (%p552) target = $region52
        $region51: #{tpu_custom_call.1} parent=31 // pred_region
          %s555 = smul.u32 2, %s29
          %s557 = ssub.s32 256, 256
          %558 = vsyncadd %s548, %s557
          %s559 = smul.addr %s28, 4
          %s560 = sadd.s32 %s555, %s559
          %s561 = smul.addr %s560, 128
          %s562 = scalar_lea.hbm %s3, %s561
          %s564 = sshll.u32 %s551, 4
          %s565 = int_to_ptr.vmem [resolvable:$true] %s564
          %567 = dma.vmem_to_hbm [thread:$0]  %s565, 256, %s562, %s548
        $region52: #{tpu_custom_call.1} parent=31 // pred_fallthru
          _
      $region32: #{tpu_custom_call.1} parent=5 // pred_fallthru
        _
      %p568 = scmp.le.s32.totalorder 2, %s18
      // Predicated region
      $region53: #{tpu_custom_call.1} parent=5 // pred_check
        %p569 = pneg %p568
      $region54: #{tpu_custom_call.1} parent=5 // pred_check_branch
        %571 = sbr.rel (%p569) target = $region56
      $region55: #{tpu_custom_call.1} parent=5 // pred_region
        %s572 = ssub.s32 %s18, 2
        // Predicated region
        $region57: #{tpu_custom_call.1} parent=55 // pred_check
          %p573 = pneg %p150
        $region58: #{tpu_custom_call.1} parent=55 // pred_check_branch
          %575 = sbr.rel (%p573) target = $region60
        $region59: #{tpu_custom_call.1} parent=55 // pred_region
          %s576 = sand.u32 %s135, 1
          %s577 = scalar_lea.sflag [#allocation4], %s576
          %s578 = sand.u32 %s135, 1
          %s579 = smul.addr %s578, 16
          %s580 = scalar_lea.vmem [#allocation7], %s579
          %581 = dma.done %s577, 256
        $region60: #{tpu_custom_call.1} parent=55 // pred_fallthru
          _
      $region56: #{tpu_custom_call.1} parent=5 // pred_fallthru
        _
    $region6: #{tpu_custom_call.1} parent=1 // loop_footer
      %s22 = sadd.s32 1, %s18
    $region7: #{tpu_custom_call.1} parent=1 // loop_footer_branch
      %17 = sbr.rel target = $region3
    $region8: #{tpu_custom_call.1} parent=1 // loop_exit
      _
    %582 = vsyncpa [#allocation3], 1
    %s583 = scalar_lea.sflag [#allocation3], 1
    %584 = vsyncpa %s583, 1
    %585 = vsyncpa [#allocation6], 1
    %s586 = scalar_lea.sflag [#allocation6], 1
    %587 = vsyncpa %s586, 1
    %588 = vsyncpa [#allocation4], 1
    %s589 = scalar_lea.sflag [#allocation4], 1
    %590 = vsyncpa %s589, 1

</llo_original>
